<compile_context>
chip_gen: v7x
topology: tpu7x:2x2x1
jax: 0.10.0
libtpu: 0.0.40
codegen_flags: <defaults>
</compile_context>

<pallas_src>
import functools
import math

import jax
import jax.numpy as jnp
from jax.experimental import pallas as pl
from jax.experimental.pallas import tpu as pltpu

_SUBLANES = 8       # sublane count of a vreg (second-minor tiling constraint)
_MAX_TILE_B = 2048  # batch rows per grid step (multiple of 8)
_VPU_K_MAX = 32     # below this contraction size, skip the MXU entirely


def _round_up(x, m):
    return ((x + m - 1) // m) * m


def _num_tensorcores_per_chip():
    """Best-effort: 2 on v7x (megacore), 1 elsewhere / on failure."""
    try:
        kind = (getattr(jax.devices()[0], "device_kind", "") or "").lower()
        if "v7" in kind:
            return 2
    except Exception:
        pass
    return 1


def dqn_kernel(x_ref, w_ref, b_ref, o_ref):
    """out = x @ W_eff + b_eff (tiny-K contraction done on the VPU)."""
    x = x_ref[...]            # (tile_b, K)   K = n_features (tiny)
    w = w_ref[...]            # (K, N)        N = n_actions (logical width)
    k_dim = x.shape[1]

    if k_dim <= _VPU_K_MAX:
        # Unrolled VPU broadcast-multiply-adds; K is a trace-time constant.
        acc = x[:, 0:1].astype(jnp.float32) * w[0:1, :]
        for k in range(1, k_dim):
            acc = acc + x[:, k:k + 1].astype(jnp.float32) * w[k:k + 1, :]
    else:
        # Fallback for large feature counts: MXU.  (If reused with wide K on
        # v6e/v7x, cast x/w to bf16 here for full MXU rate if precision allows.)
        acc = jnp.dot(x, w, preferred_element_type=jnp.float32)

    # Bias added once after the K-sum (single broadcast, no acc seeding pass).
    acc = acc + b_ref[...]
    o_ref[...] = acc.astype(o_ref.dtype)


def fold_dqn_params(w1, b1, w2, b2):
    """Fold the two activation-free linears once (hoisted out of the hot path).

    w1: (n_features, H), b1: (1, H), w2: (H, n_actions), b2: (1, n_actions)
    -> W_eff: (n_features, n_actions), b_eff: (1, n_actions)
    Valid only because the module has no activation between fc1 and fc2.
    """
    w_eff = jnp.dot(w1, w2, preferred_element_type=jnp.float32)
    b_eff = jnp.dot(b1, w2, preferred_element_type=jnp.float32) + b2
    return w_eff, b_eff.reshape(1, -1)


def dqn_apply_folded(x, w_eff, b_eff, *, max_tile_b=_MAX_TILE_B):
    """x: (B, n_features) -> (B, n_actions), using pre-folded parameters."""
    B, K = x.shape
    n_actions = w_eff.shape[1]
    max_tile_b = max(_SUBLANES, _round_up(max_tile_b, _SUBLANES))

    if B <= max_tile_b:
        # Single tile covering the whole batch (block dim == array dim is
        # always legal, even if B is not a multiple of 8).
        tile_b = B
        # v7x only: split into >= 2 tiles so the "parallel" batch axis really
        # shards across the two TensorCores.  Not done on v5e/v6e (1 TC).
        if _num_tensorcores_per_chip() >= 2 and B >= 2 * _SUBLANES:
            tile_b = _round_up(pl.cdiv(B, 2), _SUBLANES)
    else:
        tile_b = max_tile_b  # multiple of 8

    num_tiles = pl.cdiv(B, tile_b)  # partial tail block handled by Pallas

    return pl.pallas_call(
        dqn_kernel,
        out_shape=jax.ShapeDtypeStruct((B, n_actions), jnp.float32),
        grid=(num_tiles,),
        in_specs=[
            pl.BlockSpec((tile_b, K), lambda i: (i, 0)),        # x marches over batch
            pl.BlockSpec((K, n_actions), lambda i: (0, 0)),     # folded weight (resident)
            pl.BlockSpec((1, n_actions), lambda i: (0, 0)),     # folded bias   (resident)
        ],
        out_specs=pl.BlockSpec((tile_b, n_actions), lambda i: (i, 0)),
        compiler_params=pltpu.CompilerParams(
            dimension_semantics=("parallel",),  # batch tiles are independent
        ),
    )(x, w_eff, b_eff)


# Jitted entry point (max_tile_b is shape-static).
dqn_apply = jax.jit(dqn_apply_folded, static_argnames=("max_tile_b",))


def dqn_forward(x, w1, b1, w2, b2):
    """Convenience one-shot path (folds per call; prefer fold_dqn_params + dqn_apply)."""
    w_eff, b_eff = fold_dqn_params(w1, b1, w2, b2)
    return dqn_apply(x, w_eff, b_eff)


def xavier_uniform(key, fan_in, fan_out, shape, gain=1.0):
    # Matches torch.nn.init.xavier_uniform_ semantics.
    bound = gain * math.sqrt(6.0 / (fan_in + fan_out))
    return jax.random.uniform(key, shape, jnp.float32, -bound, bound)


if __name__ == "__main__":
    # Small, CartPole-like problem sizes (matches the reference module).
    batch = 8
    n_features = 4
    hidden_units = 10
    n_actions = 2

    key = jax.random.PRNGKey(0)
    k_x, k_w1, k_b1, k_w2, k_b2, k_x2 = jax.random.split(key, 6)

    x = jax.random.normal(k_x, (batch, n_features), jnp.float32)

    # fc1: Linear(n_features -> hidden_units), xavier_uniform weight
    # (weights stored transposed vs. torch's (out, in) layout).
    w1 = xavier_uniform(k_w1, n_features, hidden_units, (n_features, hidden_units))
    b1_bound = 1.0 / math.sqrt(n_features)  # PyTorch default bias init range
    b1 = jax.random.uniform(k_b1, (1, hidden_units), jnp.float32, -b1_bound, b1_bound)

    # fc2: Linear(hidden_units -> n_actions), xavier_uniform weight.
    w2 = xavier_uniform(k_w2, hidden_units, n_actions, (hidden_units, n_actions))
    b2_bound = 1.0 / math.sqrt(hidden_units)
    b2 = jax.random.uniform(k_b2, (1, n_actions), jnp.float32, -b2_bound, b2_bound)

    # Fold parameters ONCE (hoisted out of the per-step hot path).
    w_eff, b_eff = jax.block_until_ready(fold_dqn_params(w1, b1, w2, b2))

    # Pure-JAX reference of fc2(fc1(x)) (the module has no activation).
    def ref_fn(xi):
        return (xi @ w1 + b1) @ w2 + b2

    out = jax.block_until_ready(dqn_apply(x, w_eff, b_eff))
    assert out.shape == (batch, n_actions)
    assert jnp.allclose(out, ref_fn(x), atol=1e-4, rtol=1e-4), (out, ref_fn(x))

    # Also exercise the multi-tile grid with a partial (masked) tail block:
    # B=20 with tile_b=8 -> 3 grid steps, last block has only 4 valid rows.
    x2 = jax.random.normal(k_x2, (20, n_features), jnp.float32)
    out2 = jax.block_until_ready(dqn_apply(x2, w_eff, b_eff, max_tile_b=8))
    assert out2.shape == (20, n_actions)
    assert jnp.allclose(out2, ref_fn(x2), atol=1e-4, rtol=1e-4)

    print("KERNEL_OK")
</pallas_src>

<mosaic_0001>
module attributes {stable_mosaic.version = 11 : i64} {
  func.func @dqn_kernel(%arg0: i32, %arg1: memref<8x4xf32, #tpu.memory_space<vmem>>, %arg2: memref<4x2xf32, #tpu.memory_space<vmem>>, %arg3: memref<1x2xf32, #tpu.memory_space<vmem>>, %arg4: memref<8x2xf32, #tpu.memory_space<vmem>>) attributes {dimension_semantics = [#tpu.dimension_semantics<parallel>], iteration_bounds = array<i64: 1>, scalar_prefetch = 0 : i64, scratch_operands = 0 : i64, tpu.core_type = #tpu.core_type<tc>, window_params = [{transform_indices = @transform_0, window_bounds = array<i64: 8, 4>}, {pipeline_mode = #tpu.pipeline_mode<synchronous>, transform_indices = @transform_1, window_bounds = array<i64: 4, 2>}, {pipeline_mode = #tpu.pipeline_mode<synchronous>, transform_indices = @transform_2, window_bounds = array<i64: 1, 2>}, {transform_indices = @transform_3, window_bounds = array<i64: 8, 2>}]} {
    %c0 = arith.constant 0 : index
    %c0_0 = arith.constant 0 : index
    %0 = vector.load %arg1[%c0, %c0_0] : memref<8x4xf32, #tpu.memory_space<vmem>>, vector<8x4xf32>
    %c0_1 = arith.constant 0 : index
    %c0_2 = arith.constant 0 : index
    %1 = vector.load %arg2[%c0_1, %c0_2] : memref<4x2xf32, #tpu.memory_space<vmem>>, vector<4x2xf32>
    %2 = vector.extract_strided_slice %0 {offsets = [0, 0], sizes = [8, 1], strides = [1, 1]} : vector<8x4xf32> to vector<8x1xf32>
    %3 = vector.extract_strided_slice %1 {offsets = [0, 0], sizes = [1, 2], strides = [1, 1]} : vector<4x2xf32> to vector<1x2xf32>
    %4 = vector.broadcast %2 : vector<8x1xf32> to vector<8x2xf32>
    %5 = vector.broadcast %3 : vector<1x2xf32> to vector<8x2xf32>
    %6 = arith.mulf %4, %5 : vector<8x2xf32>
    %7 = vector.extract_strided_slice %0 {offsets = [0, 1], sizes = [8, 1], strides = [1, 1]} : vector<8x4xf32> to vector<8x1xf32>
    %8 = vector.extract_strided_slice %1 {offsets = [1, 0], sizes = [1, 2], strides = [1, 1]} : vector<4x2xf32> to vector<1x2xf32>
    %9 = vector.broadcast %7 : vector<8x1xf32> to vector<8x2xf32>
    %10 = vector.broadcast %8 : vector<1x2xf32> to vector<8x2xf32>
    %11 = arith.mulf %9, %10 : vector<8x2xf32>
    %12 = arith.addf %6, %11 : vector<8x2xf32>
    %13 = vector.extract_strided_slice %0 {offsets = [0, 2], sizes = [8, 1], strides = [1, 1]} : vector<8x4xf32> to vector<8x1xf32>
    %14 = vector.extract_strided_slice %1 {offsets = [2, 0], sizes = [1, 2], strides = [1, 1]} : vector<4x2xf32> to vector<1x2xf32>
    %15 = vector.broadcast %13 : vector<8x1xf32> to vector<8x2xf32>
    %16 = vector.broadcast %14 : vector<1x2xf32> to vector<8x2xf32>
    %17 = arith.mulf %15, %16 : vector<8x2xf32>
    %18 = arith.addf %12, %17 : vector<8x2xf32>
    %19 = vector.extract_strided_slice %0 {offsets = [0, 3], sizes = [8, 1], strides = [1, 1]} : vector<8x4xf32> to vector<8x1xf32>
    %20 = vector.extract_strided_slice %1 {offsets = [3, 0], sizes = [1, 2], strides = [1, 1]} : vector<4x2xf32> to vector<1x2xf32>
    %21 = vector.broadcast %19 : vector<8x1xf32> to vector<8x2xf32>
    %22 = vector.broadcast %20 : vector<1x2xf32> to vector<8x2xf32>
    %23 = arith.mulf %21, %22 : vector<8x2xf32>
    %24 = arith.addf %18, %23 : vector<8x2xf32>
    %c0_3 = arith.constant 0 : index
    %c0_4 = arith.constant 0 : index
    %25 = vector.load %arg3[%c0_3, %c0_4] : memref<1x2xf32, #tpu.memory_space<vmem>>, vector<1x2xf32>
    %26 = vector.broadcast %25 : vector<1x2xf32> to vector<8x2xf32>
    %27 = arith.addf %24, %26 : vector<8x2xf32>
    %c0_5 = arith.constant 0 : index
    %c0_6 = arith.constant 0 : index
    %28 = vector.load %arg4[%c0_5, %c0_6] : memref<8x2xf32, #tpu.memory_space<vmem>>, vector<8x2xf32>
    tpu.vector_store %arg4[%c0_5, %c0_6], %27 {strides = array<i32>} : memref<8x2xf32, #tpu.memory_space<vmem>>, vector<8x2xf32>,
    return
  }
  func.func @transform_0(%arg0: i32) -> (i32, i32) {
    %c0_i32 = arith.constant 0 : i32
    %c0_i32_0 = arith.constant 0 : i32
    return %arg0, %c0_i32 : i32, i32
  }
  func.func @transform_1(%arg0: i32) -> (i32, i32) {
    %c0_i32 = arith.constant 0 : i32
    %c0_i32_0 = arith.constant 0 : i32
    %c0_i32_1 = arith.constant 0 : i32
    return %c0_i32, %c0_i32_0 : i32, i32
  }
  func.func @transform_2(%arg0: i32) -> (i32, i32) {
    %c0_i32 = arith.constant 0 : i32
    %c0_i32_0 = arith.constant 0 : i32
    %c0_i32_1 = arith.constant 0 : i32
    return %c0_i32, %c0_i32_0 : i32, i32
  }
  func.func @transform_3(%arg0: i32) -> (i32, i32) {
    %c0_i32 = arith.constant 0 : i32
    %c0_i32_0 = arith.constant 0 : i32
    return %arg0, %c0_i32 : i32, i32
  }
}

</mosaic_0001>

<llo_original>
// kernel: dqn_apply_folded.1
$region0: #{dqn_apply_folded.1}
  #allocation0 [shape = 'u32[]', space=smem, size = 0x4, offset = 0x4, fixed_abs, tag = 'smem constant byte address 0x4 - core index']
  #allocation1 [shape = 'u32[144,128]{1,0:T(1,128)}', space=vmem, size = 0x12000, scoped, tag = 'internal scratch']
  %s0 = inlined_call_operand.vmem [shape: f32[8,4], index: 0, kind: input, shape index: {}]
  %s1 = inlined_call_operand.vmem [shape: f32[4,2], index: 1, kind: input, shape index: {}]
  %s2 = inlined_call_operand.vmem [shape: f32[1,2], index: 2, kind: input, shape index: {}]
  %s3 = inlined_call_operand.vmem [shape: f32[8,2], index: 3, kind: output, shape index: {}]
  %s4 = sld [smem:[#allocation0]]
  $region22: #{dqn_apply_folded.1} parent=0
    _
  %s6 = ssub.s32 1, %s4
  %s7 = scalar_select 0, %s6, %s4
  // Predicated region
  $region2: #{dqn_apply_folded.1} parent=0 // pred_check
    _
  $region3: #{dqn_apply_folded.1} parent=0 // pred_check_branch
    %9 = sbr.rel (0) target = $region5
  $region4: #{dqn_apply_folded.1} parent=0 // pred_region
    _
  $region5: #{dqn_apply_folded.1} parent=0 // pred_fallthru
    _
  // Predicated region
  $region6: #{dqn_apply_folded.1} parent=0 // pred_check
    _
  $region7: #{dqn_apply_folded.1} parent=0 // pred_check_branch
    %11 = sbr.rel (0) target = $region9
  $region8: #{dqn_apply_folded.1} parent=0 // pred_region
    _
  $region9: #{dqn_apply_folded.1} parent=0 // pred_fallthru
    _
  // Predicated region
  $region10: #{dqn_apply_folded.1} parent=0 // pred_check
    _
  $region11: #{dqn_apply_folded.1} parent=0 // pred_check_branch
    %13 = sbr.rel (0) target = $region13
  $region12: #{dqn_apply_folded.1} parent=0 // pred_region
    _
  $region13: #{dqn_apply_folded.1} parent=0 // pred_fallthru
    _
  %v14 = vld [vmem:[%s0] sm:$0xff]
  %v15 = vld [vmem:[%s1] sm:$0xf]
  %17 = vset.pattern.permute.xlu0 0
  %18 = vperm.xlu0 %17, %v14
  %v19 = vpop.permute.xlu0 %18
  %v21 = vlaneseq
  %v22 = vshrl.u32 %v21, 7
  %v23 = vsub.s32 0, %v22
  %v24 = vrot.slane %v15, %v23
  %v25 = vmul.f32 %v19, %v24
  %26 = vset.pattern.permute.xlu0 1
  %27 = vperm.xlu0 %26, %v14
  %v28 = vpop.permute.xlu0 %27
  %v30 = vlaneseq
  %v31 = vshrl.u32 %v30, 7
  %v32 = vsub.s32 1, %v31
  %v33 = vrot.slane %v15, %v32
  %v34 = vmul.f32 %v28, %v33
  %v35 = vadd.f32 %v25, %v34
  %36 = vset.pattern.permute.xlu0 2
  %37 = vperm.xlu0 %36, %v14
  %v38 = vpop.permute.xlu0 %37
  %v40 = vlaneseq
  %v41 = vshrl.u32 %v40, 7
  %v42 = vsub.s32 2, %v41
  %v43 = vrot.slane %v15, %v42
  %v44 = vmul.f32 %v38, %v43
  %v45 = vadd.f32 %v35, %v44
  %46 = vset.pattern.permute.xlu0 3
  %47 = vperm.xlu0 %46, %v14
  %v48 = vpop.permute.xlu0 %47
  %v50 = vlaneseq
  %v51 = vshrl.u32 %v50, 7
  %v52 = vsub.s32 3, %v51
  %v53 = vrot.slane %v15, %v52
  %v54 = vmul.f32 %v48, %v53
  %v55 = vadd.f32 %v45, %v54
  %v56 = vld [vmem:[%s2] sm:$0x1]
  %v58 = vlaneseq
  %v59 = vshrl.u32 %v58, 7
  %v60 = vsub.s32 0, %v59
  %v61 = vrot.slane %v56, %v60
  %v63 = vadd.f32 %v55, %v61
  %vm64 = vcmask 15360
  %65 = vst.msk [vmem:[%s3] sm:$0xff] %vm64, %v63
  // Predicated region
  $region14: #{dqn_apply_folded.1} parent=0 // pred_check
    _
  $region15: #{dqn_apply_folded.1} parent=0 // pred_check_branch
    %67 = sbr.rel (0) target = $region17
  $region16: #{dqn_apply_folded.1} parent=0 // pred_region
    _
  $region17: #{dqn_apply_folded.1} parent=0 // pred_fallthru
    _
  // Predicated region
  $region18: #{dqn_apply_folded.1} parent=0 // pred_check
    _
  $region19: #{dqn_apply_folded.1} parent=0 // pred_check_branch
    %69 = sbr.rel (0) target = $region21
  $region20: #{dqn_apply_folded.1} parent=0 // pred_region
    _
  $region21: #{dqn_apply_folded.1} parent=0 // pred_fallthru
    _

</llo_original>
